<compile_context>
chip_gen: v7x
topology: tpu7x:2x2x1
jax: 0.10.0
libtpu: 0.0.40
codegen_flags: <defaults>
</compile_context>

<pallas_src>
import functools
import math

import jax
import jax.numpy as jnp
from jax import lax
from jax.experimental import pallas as pl
from jax.experimental.pallas import tpu as pltpu

_BN_EPS = 1e-5
_LANE = 128
_SUBLANE = 8


def _round_up(x, m):
    return (x + m - 1) // m * m


# ---------------------------------------------------------------------------
# Kernel 1: DoG wavelet transform.
#   One grid step produces a transposed (TO, TB) output tile:
#     wout_T[o, b] = sum_i ( -(x[b,i]-t[o,i])/s[o,i] )
#                          * exp(-0.5*((x[b,i]-t[o,i])/s[o,i])^2) * w[o,i]
#   (1/scale hoisted; minus sign folded into the weights.)
# ---------------------------------------------------------------------------
def _dog_wavelet_kernel(x_ref, invs_ref, trans_ref, wwn_ref, o_ref, *,
                        batch, tb, n_in_chunks, compute_dtype):
    # Layouts (all lane-dense):
    #   x_ref:    (TB, IN)   batch on sublanes, In on lanes
    #   invs_ref: (TO, IN)   1/scale          (0 in padding)
    #   trans_ref:(TO, IN)   translation
    #   wwn_ref:  (TO, IN)   -wavelet_weights (0 in padding)
    #   o_ref:    (TO, TB)   transposed output tile (out sublane, batch lane)
    b_idx = pl.program_id(1)
    lane_ids = lax.broadcasted_iota(jnp.int32, (1, tb), 1)        # (1, TB)

    # Padded batch rows only exist in the last batch tile; skip them entirely.
    n_valid = jnp.minimum(tb, batch - b_idx * tb)

    o_ref[...] = jnp.zeros_like(o_ref)

    def row_body(r, carry):
        row = x_ref[pl.ds(r, 1), :]                               # (1, IN)
        # Partial products accumulated over 128-wide In chunks so every live
        # temporary stays a (TO, 128) tile (no spills).
        psum = jnp.zeros((o_ref.shape[0], _LANE), jnp.float32)
        for c in range(n_in_chunks):                              # small & static
            sl = slice(c * _LANE, (c + 1) * _LANE)
            xs = (row[:, sl] - trans_ref[:, sl]) * invs_ref[:, sl]  # (TO, 128) f32
            xs = xs.astype(compute_dtype)
            env = jnp.exp(-0.5 * xs * xs)                           # EUP slot
            prod = xs * env * wwn_ref[:, sl].astype(compute_dtype)
            psum = psum + prod.astype(jnp.float32)
        col = jnp.sum(psum, axis=1, keepdims=True)                # (TO, 1)
        # Deposit the per-row result into lane r of the output tile.
        o_ref[...] = jnp.where(lane_ids == r, col, o_ref[...])
        return carry

    lax.fori_loop(0, n_valid, row_body, 0)


# ---------------------------------------------------------------------------
# Kernel 2a: BatchNorm statistics (sum / sum-of-squares), tiled over Out and B.
# Padded batch rows are masked in-kernel (exact statistics, divide by B later).
# ---------------------------------------------------------------------------
def _bn_stats_kernel(w_ref, sum_ref, sq_ref, *, batch, tbn):
    @pl.when(pl.program_id(1) == 0)
    def _():
        sum_ref[...] = jnp.zeros_like(sum_ref)
        sq_ref[...] = jnp.zeros_like(sq_ref)

    rows = (pl.program_id(1) * tbn
            + lax.broadcasted_iota(jnp.int32, (tbn, 1), 0))
    wm = jnp.where(rows < batch, w_ref[...], 0.0)                 # (TBN, TO)
    sum_ref[...] += jnp.sum(wm, axis=0, keepdims=True)
    sq_ref[...] += jnp.sum(wm * wm, axis=0, keepdims=True)


# ---------------------------------------------------------------------------
# Kernel 2b: BatchNorm normalize (training mode, biased variance), fully
# parallel over Out and B tiles.
# ---------------------------------------------------------------------------
def _bn_apply_kernel(w_ref, sum_ref, sq_ref, gamma_ref, beta_ref, o_ref, *, batch):
    inv_n = 1.0 / batch
    mean = sum_ref[...] * inv_n
    var = jnp.maximum(sq_ref[...] * inv_n - mean * mean, 0.0)
    scl = gamma_ref[...] * lax.rsqrt(var + _BN_EPS)
    o_ref[...] = ((w_ref[...] - mean) * scl + beta_ref[...]).astype(o_ref.dtype)


# ---------------------------------------------------------------------------
# Parameter prep (hoisted; call once per set of weights, reuse across forwards)
# ---------------------------------------------------------------------------
def prepare_dog_kan_params(scale, translation, wavelet_weights, gamma, beta):
    out_dim, in_dim = scale.shape
    in_pad = _round_up(in_dim, _LANE)
    out_pad = _round_up(out_dim, _LANE)

    def pad_oi(p):
        return jnp.pad(p.astype(jnp.float32),
                       ((0, out_pad - out_dim), (0, in_pad - in_dim)))

    return {
        "in_dim": in_dim, "out_dim": out_dim,
        "in_pad": in_pad, "out_pad": out_pad,
        # Divide hoisted out of the hot loop (matches PyTorch exactly: a zero
        # scale would propagate inf/NaN just like the reference).  Padding is
        # zero so padded In columns / Out rows contribute exactly nothing.
        "inv_scale": pad_oi(1.0 / scale.astype(jnp.float32)),
        "translation": pad_oi(translation),
        # DoG leading minus sign folded into the weights.
        "neg_wavelet_weights": pad_oi(-wavelet_weights),
        "gamma": jnp.pad(gamma.reshape(1, -1).astype(jnp.float32),
                         ((0, 0), (0, out_pad - out_dim)), constant_values=1.0),
        "beta": jnp.pad(beta.reshape(1, -1).astype(jnp.float32),
                        ((0, 0), (0, out_pad - out_dim))),
    }


# ---------------------------------------------------------------------------
# Forward pass
# ---------------------------------------------------------------------------
def dog_kan_apply(params, x, *, compute_dtype=jnp.float32):
    """Forward pass of Dog_KAN (one WavKANLinear layer, wavelet_type='dog').

    compute_dtype=jnp.bfloat16 doubles VPU/EUP throughput of the exp chain on
    v6e/v7x (keep f32 on v5e or when bit-level agreement with f32 is needed).
    """
    B, in_dim = x.shape
    assert in_dim == params["in_dim"], "in_features mismatch"
    in_pad, out_pad = params["in_pad"], params["out_pad"]
    out_dim = params["out_dim"]

    # Batch tile is the lane axis of the transposed wavelet output, so it must
    # be 128 (or equal the full padded batch when B <= 128).
    tb = min(_LANE, _round_up(B, _SUBLANE))
    b_pad = _round_up(B, tb)
    n_b = b_pad // tb

    # Out tile (sublane axis): 128 by default; halve it when the grid would
    # otherwise have a single block so v7x's second TensorCore gets work.
    to = _LANE
    if (out_pad // to) * n_b < 2:
        to = _LANE // 2
    n_out = out_pad // to

    x_p = jnp.pad(x.astype(jnp.float32), ((0, b_pad - B), (0, in_pad - in_dim)))

    wavelet_kernel = functools.partial(
        _dog_wavelet_kernel, batch=B, tb=tb,
        n_in_chunks=in_pad // _LANE, compute_dtype=compute_dtype)

    cost = pl.CostEstimate(
        flops=8 * b_pad * out_pad * in_pad,
        transcendentals=b_pad * out_pad * in_pad,
        bytes_accessed=4 * (b_pad * in_pad + 3 * out_pad * in_pad
                            + out_pad * b_pad))

    wout_t = pl.pallas_call(
        wavelet_kernel,
        out_shape=jax.ShapeDtypeStruct((out_pad, b_pad), jnp.float32),
        grid=(n_out, n_b),
        in_specs=[
            pl.BlockSpec((tb, in_pad), lambda o, b: (b, 0)),   # x
            pl.BlockSpec((to, in_pad), lambda o, b: (o, 0)),   # 1/scale (resident across b)
            pl.BlockSpec((to, in_pad), lambda o, b: (o, 0)),   # translation
            pl.BlockSpec((to, in_pad), lambda o, b: (o, 0)),   # -wavelet_weights
        ],
        out_specs=pl.BlockSpec((to, tb), lambda o, b: (o, b)),
        compiler_params=pltpu.CompilerParams(
            dimension_semantics=("parallel", "parallel"),
            vmem_limit_bytes=40 * 1024 * 1024),
        cost_estimate=cost,
    )(x_p, params["inv_scale"], params["translation"],
      params["neg_wavelet_weights"])

    # One cheap XLA transpose back to (batch, out); padded batch rows are
    # exactly zero and get masked out of the BN statistics in-kernel.
    wout = wout_t.T                                              # (b_pad, out_pad) f32

    # --- BatchNorm1d (training mode), tiled over Out and B -------------------
    to_bn = _LANE
    n_out_bn = out_pad // to_bn

    stats_kernel = functools.partial(_bn_stats_kernel, batch=B, tbn=tb)
    wsum, wsq = pl.pallas_call(
        stats_kernel,
        out_shape=(jax.ShapeDtypeStruct((1, out_pad), jnp.float32),
                   jax.ShapeDtypeStruct((1, out_pad), jnp.float32)),
        grid=(n_out_bn, n_b),
        in_specs=[pl.BlockSpec((tb, to_bn), lambda o, b: (b, o))],
        out_specs=(pl.BlockSpec((1, to_bn), lambda o, b: (0, o)),
                   pl.BlockSpec((1, to_bn), lambda o, b: (0, o))),
        compiler_params=pltpu.CompilerParams(
            dimension_semantics=("parallel", "arbitrary")),
    )(wout)

    apply_kernel = functools.partial(_bn_apply_kernel, batch=B)
    out_p = pl.pallas_call(
        apply_kernel,
        out_shape=jax.ShapeDtypeStruct((b_pad, out_pad), x.dtype),
        grid=(n_out_bn, n_b),
        in_specs=[
            pl.BlockSpec((tb, to_bn), lambda o, b: (b, o)),
            pl.BlockSpec((1, to_bn), lambda o, b: (0, o)),
            pl.BlockSpec((1, to_bn), lambda o, b: (0, o)),
            pl.BlockSpec((1, to_bn), lambda o, b: (0, o)),
            pl.BlockSpec((1, to_bn), lambda o, b: (0, o)),
        ],
        out_specs=pl.BlockSpec((tb, to_bn), lambda o, b: (b, o)),
        compiler_params=pltpu.CompilerParams(
            dimension_semantics=("parallel", "parallel")),
    )(wout, wsum, wsq, params["gamma"], params["beta"])

    return out_p[:B, :out_dim]


def dog_kan_forward(x, scale, translation, wavelet_weights, gamma, beta, **kw):
    params = prepare_dog_kan_params(scale, translation, wavelet_weights,
                                    gamma, beta)
    return dog_kan_apply(params, x, **kw)


def _reference(x, scale, translation, wavelet_weights, gamma, beta):
    """Pure-JAX reference mirroring the PyTorch forward (wavelet_type='dog')."""
    x_scaled = (x[:, None, :] - translation[None]) / scale[None]
    wavelet = -x_scaled * jnp.exp(-0.5 * x_scaled ** 2)
    wout = jnp.sum(wavelet * wavelet_weights[None], axis=2)
    mean = jnp.mean(wout, axis=0, keepdims=True)
    var = jnp.mean((wout - mean) ** 2, axis=0, keepdims=True)
    return gamma * (wout - mean) / jnp.sqrt(var + _BN_EPS) + beta


if __name__ == "__main__":
    B, in_dim, out_dim = 8, 32, 16
    key = jax.random.PRNGKey(0)
    kx, kw1, kww = jax.random.split(key, 3)

    # Deterministic parameter init matching the nn.Module __init__.
    scale = jnp.ones((out_dim, in_dim), jnp.float32)          # nn.Parameter(torch.ones)
    translation = jnp.zeros((out_dim, in_dim), jnp.float32)   # nn.Parameter(torch.zeros)
    bound = 1.0 / math.sqrt(in_dim)                           # kaiming_uniform_(a=sqrt(5))
    wavelet_weights = jax.random.uniform(kww, (out_dim, in_dim), jnp.float32,
                                         minval=-bound, maxval=bound)
    # weight1 is initialized in the module but its output is dead code in forward.
    _weight1 = jax.random.uniform(kw1, (out_dim, in_dim), jnp.float32,
                                  minval=-bound, maxval=bound)
    gamma = jnp.ones((out_dim,), jnp.float32)   # BatchNorm1d weight
    beta = jnp.zeros((out_dim,), jnp.float32)   # BatchNorm1d bias

    x = jax.random.normal(kx, (B, in_dim), jnp.float32)

    params = prepare_dog_kan_params(scale, translation, wavelet_weights,
                                    gamma, beta)
    out = dog_kan_apply(params, x)
    out = jax.block_until_ready(out)

    ref = _reference(x, scale, translation, wavelet_weights, gamma, beta)
    assert out.shape == (B, out_dim)
    assert jnp.allclose(out, ref, atol=1e-4, rtol=1e-4), \
        "mismatch vs pure-JAX reference"

    print("KERNEL_OK")
</pallas_src>

<mosaic_0001>
module attributes {stable_mosaic.version = 11 : i64} {
  func.func @_dog_wavelet_kernel(%arg0: i32, %arg1: i32, %arg2: memref<8x128xf32, #tpu.memory_space<vmem>>, %arg3: memref<64x128xf32, #tpu.memory_space<vmem>>, %arg4: memref<64x128xf32, #tpu.memory_space<vmem>>, %arg5: memref<64x128xf32, #tpu.memory_space<vmem>>, %arg6: memref<64x8xf32, #tpu.memory_space<vmem>>) attributes {dimension_semantics = [#tpu.dimension_semantics<parallel>, #tpu.dimension_semantics<parallel>], iteration_bounds = array<i64: 2, 1>, scalar_prefetch = 0 : i64, scratch_operands = 0 : i64, tpu.core_type = #tpu.core_type<tc>, window_params = [{transform_indices = @transform_0, window_bounds = array<i64: 8, 128>}, {transform_indices = @transform_1, window_bounds = array<i64: 64, 128>}, {transform_indices = @transform_2, window_bounds = array<i64: 64, 128>}, {transform_indices = @transform_3, window_bounds = array<i64: 64, 128>}, {transform_indices = @transform_4, window_bounds = array<i64: 64, 8>}]} {
    %0 = tpu.iota {dimensions = array<i32: 1>} : vector<1x8xi32>
    %c8_i32 = arith.constant 8 : i32
    %1 = arith.muli %arg1, %c8_i32 : i32
    %c8_i32_0 = arith.constant 8 : i32
    %2 = arith.subi %c8_i32_0, %1 : i32
    %c8_i32_1 = arith.constant 8 : i32
    %3 = arith.minsi %c8_i32_1, %2 : i32
    %cst = arith.constant 0.000000e+00 : f32
    %4 = vector.broadcast %cst : f32 to vector<64x8xf32>
    %c0 = arith.constant 0 : index
    %c0_2 = arith.constant 0 : index
    %5 = vector.load %arg6[%c0, %c0_2] : memref<64x8xf32, #tpu.memory_space<vmem>>, vector<64x8xf32>
    tpu.vector_store %arg6[%c0, %c0_2], %4 {strides = array<i32>} : memref<64x8xf32, #tpu.memory_space<vmem>>, vector<64x8xf32>,
    %c0_i32 = arith.constant 0 : i32
    %c0_i32_3 = arith.constant 0 : i32
    %6 = arith.subi %3, %c0_i32_3 : i32
    %7 = arith.addi %c0_i32_3, %6 : i32
    %c1_i32 = arith.constant 1 : i32
    scf.for %arg7 = %c0_i32_3 to %7 step %c1_i32  : i32 {
      %8 = arith.index_cast %arg7 : i32 to index
      %c0_4 = arith.constant 0 : index
      %9 = vector.load %arg2[%8, %c0_4] : memref<8x128xf32, #tpu.memory_space<vmem>>, vector<1x128xf32>
      %cst_5 = arith.constant 0.000000e+00 : f32
      %10 = vector.broadcast %cst_5 : f32 to vector<64x128xf32>
      %c0_6 = arith.constant 0 : index
      %c0_7 = arith.constant 0 : index
      %11 = vector.load %arg4[%c0_6, %c0_7] : memref<64x128xf32, #tpu.memory_space<vmem>>, vector<64x128xf32>
      %12 = vector.broadcast %9 : vector<1x128xf32> to vector<64x128xf32>
      %13 = arith.subf %12, %11 : vector<64x128xf32>
      %c0_8 = arith.constant 0 : index
      %c0_9 = arith.constant 0 : index
      %14 = vector.load %arg3[%c0_8, %c0_9] : memref<64x128xf32, #tpu.memory_space<vmem>>, vector<64x128xf32>
      %15 = arith.mulf %13, %14 : vector<64x128xf32>
      %cst_10 = arith.constant -5.000000e-01 : f32
      %16 = vector.broadcast %cst_10 : f32 to vector<64x128xf32>
      %17 = arith.mulf %16, %15 : vector<64x128xf32>
      %18 = arith.mulf %17, %15 : vector<64x128xf32>
      %19 = math.exp %18 : vector<64x128xf32>
      %20 = arith.mulf %15, %19 : vector<64x128xf32>
      %c0_11 = arith.constant 0 : index
      %c0_12 = arith.constant 0 : index
      %21 = vector.load %arg5[%c0_11, %c0_12] : memref<64x128xf32, #tpu.memory_space<vmem>>, vector<64x128xf32>
      %22 = arith.mulf %20, %21 : vector<64x128xf32>
      %23 = arith.addf %10, %22 : vector<64x128xf32>
      %cst_13 = arith.constant dense<0.000000e+00> : vector<64xf32>
      %24 = vector.multi_reduction <add>, %23, %cst_13 [1] : vector<64x128xf32> to vector<64xf32>
      %25 = vector.shape_cast %24 : vector<64xf32> to vector<64x1xf32>
      %26 = vector.broadcast %arg7 : i32 to vector<1x8xi32>
      %27 = arith.cmpi eq, %0, %26 : vector<1x8xi32>
      %c0_14 = arith.constant 0 : index
      %c0_15 = arith.constant 0 : index
      %28 = vector.load %arg6[%c0_14, %c0_15] : memref<64x8xf32, #tpu.memory_space<vmem>>, vector<64x8xf32>
      %29 = vector.shape_cast %27 : vector<1x8xi1> to vector<1x8xi1>
      %30 = vector.broadcast %29 : vector<1x8xi1> to vector<64x8xi1>
      %31 = vector.shape_cast %25 : vector<64x1xf32> to vector<64x1xf32>
      %32 = vector.broadcast %31 : vector<64x1xf32> to vector<64x8xf32>
      %33 = arith.select %30, %32, %28 : vector<64x8xi1>, vector<64x8xf32>
      %c0_16 = arith.constant 0 : index
      %c0_17 = arith.constant 0 : index
      %34 = vector.load %arg6[%c0_16, %c0_17] : memref<64x8xf32, #tpu.memory_space<vmem>>, vector<64x8xf32>
      tpu.vector_store %arg6[%c0_16, %c0_17], %33 {strides = array<i32>} : memref<64x8xf32, #tpu.memory_space<vmem>>, vector<64x8xf32>,
    }
    return
  }
  func.func @transform_0(%arg0: i32, %arg1: i32) -> (i32, i32) {
    %c0_i32 = arith.constant 0 : i32
    %c0_i32_0 = arith.constant 0 : i32
    return %arg1, %c0_i32 : i32, i32
  }
  func.func @transform_1(%arg0: i32, %arg1: i32) -> (i32, i32) {
    %c0_i32 = arith.constant 0 : i32
    %c0_i32_0 = arith.constant 0 : i32
    return %arg0, %c0_i32 : i32, i32
  }
  func.func @transform_2(%arg0: i32, %arg1: i32) -> (i32, i32) {
    %c0_i32 = arith.constant 0 : i32
    %c0_i32_0 = arith.constant 0 : i32
    return %arg0, %c0_i32 : i32, i32
  }
  func.func @transform_3(%arg0: i32, %arg1: i32) -> (i32, i32) {
    %c0_i32 = arith.constant 0 : i32
    %c0_i32_0 = arith.constant 0 : i32
    return %arg0, %c0_i32 : i32, i32
  }
  func.func @transform_4(%arg0: i32, %arg1: i32) -> (i32, i32) {
    %c0_i32 = arith.constant 0 : i32
    return %arg0, %arg1 : i32, i32
  }
}

</mosaic_0001>

<llo_original>
// kernel: tpu_custom_call.1
$region0: #{tpu_custom_call.1}
  #allocation0 [shape = 'u32[]', space=smem, size = 0x4, offset = 0x4, fixed_abs, tag = 'smem constant byte address 0x4 - core index']
  #allocation1 [shape = 'u32[144,128]{1,0:T(1,128)}', space=vmem, size = 0x12000, scoped, tag = 'internal scratch']
  %s0 = inlined_call_operand.hbm [shape: f32[8,128], index: 0, kind: input, shape index: {}]
  %s1 = inlined_call_operand.hbm [shape: f32[128,128], index: 1, kind: input, shape index: {}]
  %s2 = inlined_call_operand.hbm [shape: f32[128,128], index: 2, kind: input, shape index: {}]
  %s3 = inlined_call_operand.hbm [shape: f32[128,128], index: 3, kind: input, shape index: {}]
  %s4 = inlined_call_operand.vmem [shape: f32[128,8], index: 4, kind: output, shape index: {}]
  %s5 = sld [smem:[#allocation0]]
  $region72: #{tpu_custom_call.1} parent=0
    _
  %s7 = ssub.s32 1, %s5
  %s8 = scalar_select 0, %s7, %s5
  $region1: #{tpu_custom_call.1} parent=0
    #allocation2 [shape = 'u8[4096]{0}', space=vmem, size = 0x1000, scoped, tag = 'input window, operand 0, single buffered']
    #allocation3 [shape = 's32[2]{0}', space=sflag, size = 0x8, scoped, tag = 'scoped memory for tpu_custom_call.1']
    #allocation4 [shape = 'u8[65536]{0}', space=vmem, size = 0x10000, scoped, tag = 'input window, operand 1']
    #allocation5 [shape = 's32[2]{0}', space=sflag, size = 0x8, scoped, tag = 'scoped memory for tpu_custom_call.1']
    #allocation6 [shape = 'u8[65536]{0}', space=vmem, size = 0x10000, scoped, tag = 'input window, operand 2']
    #allocation7 [shape = 'u8[65536]{0}', space=vmem, size = 0x10000, scoped, tag = 'input window, operand 3']
    #allocation8 [shape = 's32[2]{0}', space=sflag, size = 0x8, scoped, tag = 'scoped memory for tpu_custom_call.1']
    %9 = vsyncpa [#allocation3], 0
    %10 = vsyncpa [#allocation5], 0
    %s11 = scalar_lea.sflag [#allocation5], 1
    %12 = vsyncpa %s11, 0
    %13 = vsyncpa [#allocation8], 0
    %s14 = scalar_lea.sflag [#allocation8], 1
    %15 = vsyncpa %s14, 0
    loop: start=0, step=1, limit=4
    $region2: #{tpu_custom_call.1} parent=1 // loop_pre_header
      _
    $region3: #{tpu_custom_call.1} parent=1 // loop_header
      %s17 = sphi 0, %s21
      %p18 = scmp.ge.s32.totalorder %s17, 4
      %s24 = sphi 0, %s36
      %s25 = sphi 0, %s32
      %s26 = sphi 0, %s24
      %s27 = sphi 0, %s25
      %s28 = sphi 0, %s26
      %s29 = sphi 0, %s27
      %s39 = sphi 0, %s41
      %s42 = sphi 0, %s39
      %s43 = sphi 0, %s42
      %s59 = sphi 0, %s43
      %s65 = sphi 0, %s67
      %s68 = sphi 0, %s65
      %s69 = sphi 0, %s68
      %s85 = sphi 0, %s69
      %s91 = sphi 0, %s93
      %s94 = sphi 0, %s91
      %s95 = sphi 0, %s94
      %s111 = sphi 0, %s95
      %s117 = sphi 0, %s119
      %s120 = sphi 0, %s117
      %s121 = sphi 0, %s120
      %s137 = sphi 0, %s121
      %s145 = sphi 0, %s147
      %s148 = sphi 0, %s145
      %s149 = sphi 0, %s148
      %s165 = sphi 0, %s149
    $region4: #{tpu_custom_call.1} parent=1 // loop_header_branch
      %20 = sbr.rel (%p18) target = $region8
    $region5: #{tpu_custom_call.1} parent=1 // loop_body
      %s22 = ssub.s32 %s17, 1
      %s23 = ssub.s32 %s17, 2
      %s30 = sadd.s32 1, %s25
      %p31 = scmp.ge.s32.totalorder %s30, 1
      %s32 = scalar_select %p31, 0, %s30
      %s33 = sadd.s32 1, %s24
      %s34 = scalar_select %p31, %s33, %s24
      %p35 = scmp.ge.s32.totalorder %s34, 2
      %s36 = scalar_select %p35, 0, %s34
      %s37 = ssub.s32 %s25, %s32
      %p38 = scmp.eq.s32.totalorder %s37, 0
      %s40 = sadd.s32 %s39, 1
      %s41 = scalar_select %p38, %s39, %s40
      %p44 = pneg %p38
      %p45 = scmp.eq.s32.totalorder %s17, 1
      %p46 = por %p44, %p45
      %p47 = scmp.ne.s32.totalorder %s39, %s42
      %p48 = scmp.eq.s32.totalorder %s17, 0
      %p49 = por %p47, %p48
      %p50 = scmp.ne.s32.totalorder %s39, %s42
      %p51 = scmp.eq.s32.totalorder %s22, 1
      %p52 = por %p50, %p51
      %p53 = scmp.ne.s32.totalorder %s42, %s43
      %p54 = scmp.eq.s32.totalorder %s22, 0
      %p55 = por %p53, %p54
      %p56 = scmp.ne.s32.totalorder %s42, %s43
      %p57 = scmp.eq.s32.totalorder %s23, 1
      %p58 = por %p56, %p57
      %p60 = scmp.ne.s32.totalorder %s43, %s59
      %p61 = scmp.eq.s32.totalorder %s23, 0
      %p62 = por %p60, %p61
      %s63 = ssub.s32 %s24, %s36
      %p64 = scmp.eq.s32.totalorder %s63, 0
      %s66 = sadd.s32 %s65, 1
      %s67 = scalar_select %p64, %s65, %s66
      %p70 = pneg %p64
      %p71 = scmp.eq.s32.totalorder %s17, 1
      %p72 = por %p70, %p71
      %p73 = scmp.ne.s32.totalorder %s65, %s68
      %p74 = scmp.eq.s32.totalorder %s17, 0
      %p75 = por %p73, %p74
      %p76 = scmp.ne.s32.totalorder %s65, %s68
      %p77 = scmp.eq.s32.totalorder %s22, 1
      %p78 = por %p76, %p77
      %p79 = scmp.ne.s32.totalorder %s68, %s69
      %p80 = scmp.eq.s32.totalorder %s22, 0
      %p81 = por %p79, %p80
      %p82 = scmp.ne.s32.totalorder %s68, %s69
      %p83 = scmp.eq.s32.totalorder %s23, 1
      %p84 = por %p82, %p83
      %p86 = scmp.ne.s32.totalorder %s69, %s85
      %p87 = scmp.eq.s32.totalorder %s23, 0
      %p88 = por %p86, %p87
      %s89 = ssub.s32 %s24, %s36
      %p90 = scmp.eq.s32.totalorder %s89, 0
      %s92 = sadd.s32 %s91, 1
      %s93 = scalar_select %p90, %s91, %s92
      %p96 = pneg %p90
      %p97 = scmp.eq.s32.totalorder %s17, 1
      %p98 = por %p96, %p97
      %p99 = scmp.ne.s32.totalorder %s91, %s94
      %p100 = scmp.eq.s32.totalorder %s17, 0
      %p101 = por %p99, %p100
      %p102 = scmp.ne.s32.totalorder %s91, %s94
      %p103 = scmp.eq.s32.totalorder %s22, 1
      %p104 = por %p102, %p103
      %p105 = scmp.ne.s32.totalorder %s94, %s95
      %p106 = scmp.eq.s32.totalorder %s22, 0
      %p107 = por %p105, %p106
      %p108 = scmp.ne.s32.totalorder %s94, %s95
      %p109 = scmp.eq.s32.totalorder %s23, 1
      %p110 = por %p108, %p109
      %p112 = scmp.ne.s32.totalorder %s95, %s111
      %p113 = scmp.eq.s32.totalorder %s23, 0
      %p114 = por %p112, %p113
      %s115 = ssub.s32 %s24, %s36
      %p116 = scmp.eq.s32.totalorder %s115, 0
      %s118 = sadd.s32 %s117, 1
      %s119 = scalar_select %p116, %s117, %s118
      %p122 = pneg %p116
      %p123 = scmp.eq.s32.totalorder %s17, 1
      %p124 = por %p122, %p123
      %p125 = scmp.ne.s32.totalorder %s117, %s120
      %p126 = scmp.eq.s32.totalorder %s17, 0
      %p127 = por %p125, %p126
      %p128 = scmp.ne.s32.totalorder %s117, %s120
      %p129 = scmp.eq.s32.totalorder %s22, 1
      %p130 = por %p128, %p129
      %p131 = scmp.ne.s32.totalorder %s120, %s121
      %p132 = scmp.eq.s32.totalorder %s22, 0
      %p133 = por %p131, %p132
      %p134 = scmp.ne.s32.totalorder %s120, %s121
      %p135 = scmp.eq.s32.totalorder %s23, 1
      %p136 = por %p134, %p135
      %p138 = scmp.ne.s32.totalorder %s121, %s137
      %p139 = scmp.eq.s32.totalorder %s23, 0
      %p140 = por %p138, %p139
      %s141 = ssub.s32 %s24, %s36
      %s142 = ssub.s32 %s25, %s32
      %s143 = sor.u32 %s141, %s142
      %p144 = scmp.eq.s32.totalorder %s143, 0
      %s146 = sadd.s32 %s145, 1
      %s147 = scalar_select %p144, %s145, %s146
      %p150 = pneg %p144
      %p151 = scmp.eq.s32.totalorder %s17, 1
      %p152 = por %p150, %p151
      %p153 = scmp.ne.s32.totalorder %s145, %s148
      %p154 = scmp.eq.s32.totalorder %s17, 0
      %p155 = por %p153, %p154
      %p156 = scmp.ne.s32.totalorder %s145, %s148
      %p157 = scmp.eq.s32.totalorder %s22, 1
      %p158 = por %p156, %p157
      %p159 = scmp.ne.s32.totalorder %s148, %s149
      %p160 = scmp.eq.s32.totalorder %s22, 0
      %p161 = por %p159, %p160
      %p162 = scmp.ne.s32.totalorder %s148, %s149
      %p163 = scmp.eq.s32.totalorder %s23, 1
      %p164 = por %p162, %p163
      %p166 = scmp.ne.s32.totalorder %s149, %s165
      %p167 = scmp.eq.s32.totalorder %s23, 0
      %p168 = por %p166, %p167
      %p169 = scmp.le.s32.totalorder 1, %s17
      %p170 = scmp.lt.s32.totalorder %s17, 3
      %p171 = pnand %p169, %p170
      %p172 = pneg %p171
      // Predicated region
      $region9: #{tpu_custom_call.1} parent=5 // pred_check
        _
      $region10: #{tpu_custom_call.1} parent=5 // pred_check_branch
        %174 = sbr.rel (%p171) target = $region12
      $region11: #{tpu_custom_call.1} parent=5 // pred_region
        %s175 = ssub.s32 %s17, 1
        // Predicated region
        $region13: #{tpu_custom_call.1} parent=11 // pred_check
          %p176 = pneg %p55
        $region14: #{tpu_custom_call.1} parent=11 // pred_check_branch
          %178 = sbr.rel (%p176) target = $region16
        $region15: #{tpu_custom_call.1} parent=11 // pred_region
          %s180 = ssub.s32 128, 128
          %181 = vsyncadd [#allocation3], %s180
          %s182 = smul.addr %s27, 128
          %s183 = scalar_lea.hbm %s0, %s182
          %s185 = sshll.u32 [#allocation2], 4
          %s186 = int_to_ptr.vmem [resolvable:$true] %s185
          %188 = dma.hbm_to_vmem [thread:$0]  %s183, 128, %s186, [#allocation3]
        $region16: #{tpu_custom_call.1} parent=11 // pred_fallthru
          _
      $region12: #{tpu_custom_call.1} parent=5 // pred_fallthru
        _
      %p189 = scmp.lt.s32.totalorder %s17, 2
      // Predicated region
      $region17: #{tpu_custom_call.1} parent=5 // pred_check
        %p190 = pneg %p189
      $region18: #{tpu_custom_call.1} parent=5 // pred_check_branch
        %192 = sbr.rel (%p190) target = $region20
      $region19: #{tpu_custom_call.1} parent=5 // pred_region
        // Predicated region
        $region21: #{tpu_custom_call.1} parent=19 // pred_check
          %p193 = pneg %p75
        $region22: #{tpu_custom_call.1} parent=19 // pred_check_branch
          %195 = sbr.rel (%p193) target = $region24
        $region23: #{tpu_custom_call.1} parent=19 // pred_region
          %s196 = sand.u32 %s17, 1
          %s197 = scalar_lea.sflag [#allocation5], %s196
          %s198 = sand.u32 %s65, 1
          %s199 = smul.addr %s198, 64
          %s200 = scalar_lea.vmem [#allocation4], %s199
          %s201 = smul.u32 8, %s24
          %s203 = ssub.s32 1024, 1024
          %204 = vsyncadd %s197, %s203
          %s205 = smul.addr %s201, 128
          %s206 = scalar_lea.hbm %s1, %s205
          %s207 = sshll.u32 %s200, 4
          %s208 = int_to_ptr.vmem [resolvable:$true] %s207
          %213 = dma.hbm_to_vmem [thread:$0]  %s206, 1024, %s208, %s197, 128, 128, 8
        $region24: #{tpu_custom_call.1} parent=19 // pred_fallthru
          _
        // Predicated region
        $region25: #{tpu_custom_call.1} parent=19 // pred_check
          %p214 = pneg %p101
        $region26: #{tpu_custom_call.1} parent=19 // pred_check_branch
          %216 = sbr.rel (%p214) target = $region28
        $region27: #{tpu_custom_call.1} parent=19 // pred_region
          %s217 = sand.u32 %s17, 1
          %s218 = scalar_lea.sflag [#allocation5], %s217
          %s219 = sand.u32 %s91, 1
          %s220 = smul.addr %s219, 64
          %s221 = scalar_lea.vmem [#allocation6], %s220
          %s222 = smul.u32 8, %s24
          %s224 = ssub.s32 1024, 1024
          %225 = vsyncadd %s218, %s224
          %s226 = smul.addr %s222, 128
          %s227 = scalar_lea.hbm %s2, %s226
          %s228 = sshll.u32 %s221, 4
          %s229 = int_to_ptr.vmem [resolvable:$true] %s228
          %234 = dma.hbm_to_vmem [thread:$0]  %s227, 1024, %s229, %s218, 128, 128, 8
        $region28: #{tpu_custom_call.1} parent=19 // pred_fallthru
          _
        // Predicated region
        $region29: #{tpu_custom_call.1} parent=19 // pred_check
          %p235 = pneg %p127
        $region30: #{tpu_custom_call.1} parent=19 // pred_check_branch
          %237 = sbr.rel (%p235) target = $region32
        $region31: #{tpu_custom_call.1} parent=19 // pred_region
          %s238 = sand.u32 %s117, 1
          %s239 = scalar_lea.sflag [#allocation8], %s238
          %s240 = sand.u32 %s117, 1
          %s241 = smul.addr %s240, 64
          %s242 = scalar_lea.vmem [#allocation7], %s241
          %s243 = smul.u32 8, %s24
          %s245 = ssub.s32 1024, 1024
          %246 = vsyncadd %s239, %s245
          %s247 = smul.addr %s243, 128
          %s248 = scalar_lea.hbm %s3, %s247
          %s249 = sshll.u32 %s242, 4
          %s250 = int_to_ptr.vmem [resolvable:$true] %s249
          %255 = dma.hbm_to_vmem [thread:$0]  %s248, 1024, %s250, %s239, 128, 128, 8
        $region32: #{tpu_custom_call.1} parent=19 // pred_fallthru
          _
      $region20: #{tpu_custom_call.1} parent=5 // pred_fallthru
        _
      %p256 = scmp.le.s32.totalorder 1, %s17
      %p257 = scmp.lt.s32.totalorder %s17, 3
      %p258 = pnand %p256, %p257
      %p259 = pneg %p258
      // Predicated region
      $region33: #{tpu_custom_call.1} parent=5 // pred_check
        _
      $region34: #{tpu_custom_call.1} parent=5 // pred_check_branch
        %261 = sbr.rel (%p258) target = $region36
      $region35: #{tpu_custom_call.1} parent=5 // pred_region
        %s262 = ssub.s32 %s17, 1
        // Predicated region
        $region37: #{tpu_custom_call.1} parent=35 // pred_check
          %p263 = pneg %p55
        $region38: #{tpu_custom_call.1} parent=35 // pred_check_branch
          %265 = sbr.rel (%p263) target = $region40
        $region39: #{tpu_custom_call.1} parent=35 // pred_region
          %266 = dma.done [#allocation3], 128
        $region40: #{tpu_custom_call.1} parent=35 // pred_fallthru
          _
        %s267 = sand.u32 %s22, 1
        %s268 = scalar_lea.sflag [#allocation5], %s267
        %s269 = sand.u32 %s68, 1
        %s270 = smul.addr %s269, 64
        %s271 = scalar_lea.vmem [#allocation4], %s270
        // Predicated region
        $region41: #{tpu_custom_call.1} parent=35 // pred_check
          %p272 = pneg %p81
        $region42: #{tpu_custom_call.1} parent=35 // pred_check_branch
          %274 = sbr.rel (%p272) target = $region44
        $region43: #{tpu_custom_call.1} parent=35 // pred_region
          %275 = dma.done %s268, 1024
        $region44: #{tpu_custom_call.1} parent=35 // pred_fallthru
          _
        %s276 = sand.u32 %s22, 1
        %s277 = scalar_lea.sflag [#allocation5], %s276
        %s278 = sand.u32 %s94, 1
        %s279 = smul.addr %s278, 64
        %s280 = scalar_lea.vmem [#allocation6], %s279
        // Predicated region
        $region45: #{tpu_custom_call.1} parent=35 // pred_check
          %p281 = pneg %p107
        $region46: #{tpu_custom_call.1} parent=35 // pred_check_branch
          %283 = sbr.rel (%p281) target = $region48
        $region47: #{tpu_custom_call.1} parent=35 // pred_region
          %284 = dma.done %s277, 1024
        $region48: #{tpu_custom_call.1} parent=35 // pred_fallthru
          _
        %s285 = sand.u32 %s120, 1
        %s286 = scalar_lea.sflag [#allocation8], %s285
        %s287 = sand.u32 %s120, 1
        %s288 = smul.addr %s287, 64
        %s289 = scalar_lea.vmem [#allocation7], %s288
        // Predicated region
        $region49: #{tpu_custom_call.1} parent=35 // pred_check
          %p290 = pneg %p133
        $region50: #{tpu_custom_call.1} parent=35 // pred_check_branch
          %292 = sbr.rel (%p290) target = $region52
        $region51: #{tpu_custom_call.1} parent=35 // pred_region
          %293 = dma.done %s286, 1024
        $region52: #{tpu_custom_call.1} parent=35 // pred_fallthru
          _
        %p294 = pneg %p55
        %p295 = pneg %p52
        %s296 = sand.u32 %s22, 1
        %s297 = scalar_lea.sflag [#allocation5], %s296
        %s298 = sand.u32 %s68, 1
        %s299 = smul.addr %s298, 64
        %s300 = scalar_lea.vmem [#allocation4], %s299
        %p301 = pneg %p81
        %p302 = pneg %p78
        %s303 = sand.u32 %s22, 1
        %s304 = scalar_lea.sflag [#allocation5], %s303
        %s305 = sand.u32 %s94, 1
        %s306 = smul.addr %s305, 64
        %s307 = scalar_lea.vmem [#allocation6], %s306
        %p308 = pneg %p107
        %p309 = pneg %p104
        %s310 = sand.u32 %s120, 1
        %s311 = scalar_lea.sflag [#allocation8], %s310
        %s312 = sand.u32 %s120, 1
        %s313 = smul.addr %s312, 64
        %s314 = scalar_lea.vmem [#allocation7], %s313
        %p315 = pneg %p133
        %p316 = pneg %p130
        %p317 = pneg %p161
        %p318 = pneg %p158
        %s319 = smul.u32 8, %s26
        %p320 = scmp.lt.s32.totalorder %s319, 15
        %s321 = scalar_select %p320, %s319, 15
        %p322 = scmp.lt.s32.totalorder %s27, 0
        %s323 = scalar_select %p322, %s27, 0
        %s324 = sadd.s32 %s323, %s321
        %s325 = smul.addr %s324, 8
        %s326 = scalar_lea.vmem %s4, %s325
        %s327 = smul.u32 8, %s26
        %s328 = smul.u32 8, %s26
        %s329 = smul.u32 8, %s26
        %s330 = smul.u32 8, %s26
        %p331 = scmp.lt.s32.totalorder %s330, 15
        %s332 = scalar_select %p331, %s330, 15
        %p333 = scmp.lt.s32.totalorder %s27, 0
        %s334 = scalar_select %p333, %s27, 0
        %s335 = sadd.s32 %s334, %s332
        %s336 = smul.addr %s335, 8
        %s337 = scalar_lea.vmem %s4, %s336
        %s338 = smul.u32 8, %s26
        %v339 = vlaneseq
        %v340 = vand.u32 %v339, 127
        %s341 = smul.u32 %s27, 8
        %s342 = ssub.s32 8, %s341
        %p343 = scmp.lt.s32.totalorder %s342, 8
        %s344 = scalar_select %p343, %s342, 8
        %vm345 = vcmask 64512
        %346 = vst.msk [vmem:[%s337] sm:$0xff] %vm345, 0.0
        %347 = vst.msk [vmem:[%s337 + $0x8] sm:$0xff] %vm345, 0.0
        %348 = vst.msk [vmem:[%s337 + $0x10] sm:$0xff] %vm345, 0.0
        %349 = vst.msk [vmem:[%s337 + $0x18] sm:$0xff] %vm345, 0.0
        %350 = vst.msk [vmem:[%s337 + $0x20] sm:$0xff] %vm345, 0.0
        %351 = vst.msk [vmem:[%s337 + $0x28] sm:$0xff] %vm345, 0.0
        %352 = vst.msk [vmem:[%s337 + $0x30] sm:$0xff] %vm345, 0.0
        %353 = vst.msk [vmem:[%s337 + $0x38] sm:$0xff] %vm345, 0.0
        // While loop
        $region53: #{tpu_custom_call.1} parent=35 // loop_pre_header
          _
        $region54: #{tpu_custom_call.1} parent=35 // loop_header
          %s355 = sphi 0, %s357
          %p356 = scmp.ge.s32.totalorder %s355, %s344
        $region55: #{tpu_custom_call.1} parent=35 // loop_header_branch
          %359 = sbr.rel (%p356) target = $region59
        $region56: #{tpu_custom_call.1} parent=35 // loop_body
          %s360 = scalar_lea.vmem [#allocation2], %s355
          %v361 = vld [vmem:[%s360] sm:$0x1]
          %v362 = vld [vmem:[%s280] sm:$0xff]
          %v363 = vld [vmem:[%s280 + $0x8] sm:$0xff]
          %v364 = vld [vmem:[%s280 + $0x10] sm:$0xff]
          %v365 = vld [vmem:[%s280 + $0x18] sm:$0xff]
          %v366 = vld [vmem:[%s280 + $0x20] sm:$0xff]
          %v367 = vld [vmem:[%s280 + $0x28] sm:$0xff]
          %v368 = vld [vmem:[%s280 + $0x30] sm:$0xff]
          %v369 = vld [vmem:[%s280 + $0x38] sm:$0xff]
          %v370 = vlaneseq
          %v371 = vshrl.u32 %v370, 7
          %v372 = vsub.s32 0, %v371
          %v373 = vrot.slane %v361, %v372
          %v374 = vsub.f32 %v373, %v362
          %v375 = vsub.f32 %v373, %v363
          %v376 = vsub.f32 %v373, %v364
          %v377 = vsub.f32 %v373, %v365
          %v378 = vsub.f32 %v373, %v366
          %v379 = vsub.f32 %v373, %v367
          %v380 = vsub.f32 %v373, %v368
          %v381 = vsub.f32 %v373, %v369
          %v382 = vld [vmem:[%s271] sm:$0xff]
          %v383 = vld [vmem:[%s271 + $0x8] sm:$0xff]
          %v384 = vld [vmem:[%s271 + $0x10] sm:$0xff]
          %v385 = vld [vmem:[%s271 + $0x18] sm:$0xff]
          %v386 = vld [vmem:[%s271 + $0x20] sm:$0xff]
          %v387 = vld [vmem:[%s271 + $0x28] sm:$0xff]
          %v388 = vld [vmem:[%s271 + $0x30] sm:$0xff]
          %v389 = vld [vmem:[%s271 + $0x38] sm:$0xff]
          %v390 = vmul.f32 %v374, %v382
          %v391 = vmul.f32 %v375, %v383
          %v392 = vmul.f32 %v376, %v384
          %v393 = vmul.f32 %v377, %v385
          %v394 = vmul.f32 %v378, %v386
          %v395 = vmul.f32 %v379, %v387
          %v396 = vmul.f32 %v380, %v388
          %v397 = vmul.f32 %v381, %v389
          %v398 = vmul.f32 %v390, -0.5
          %v399 = vmul.f32 %v391, -0.5
          %v400 = vmul.f32 %v392, -0.5
          %v401 = vmul.f32 %v393, -0.5
          %v402 = vmul.f32 %v394, -0.5
          %v403 = vmul.f32 %v395, -0.5
          %v404 = vmul.f32 %v396, -0.5
          %v405 = vmul.f32 %v397, -0.5
          %v406 = vmul.f32 %v398, %v390
          %v407 = vmul.f32 %v399, %v391
          %v408 = vmul.f32 %v400, %v392
          %v409 = vmul.f32 %v401, %v393
          %v410 = vmul.f32 %v402, %v394
          %v411 = vmul.f32 %v403, %v395
          %v412 = vmul.f32 %v404, %v396
          %v413 = vmul.f32 %v405, %v397
          %v414 = vmul.f32 %v406, 1.442695
          %v415 = vpow.pop %v414
          %v416 = vmul.f32 %v407, 1.442695
          %v417 = vpow.pop %v416
          %v418 = vmul.f32 %v408, 1.442695
          %v419 = vpow.pop %v418
          %v420 = vmul.f32 %v409, 1.442695
          %v421 = vpow.pop %v420
          %v422 = vmul.f32 %v410, 1.442695
          %v423 = vpow.pop %v422
          %v424 = vmul.f32 %v411, 1.442695
          %v425 = vpow.pop %v424
          %v426 = vmul.f32 %v412, 1.442695
          %v427 = vpow.pop %v426
          %v428 = vmul.f32 %v413, 1.442695
          %v429 = vpow.pop %v428
          %v430 = vmul.f32 %v390, %v415
          %v431 = vmul.f32 %v391, %v417
          %v432 = vmul.f32 %v392, %v419
          %v433 = vmul.f32 %v393, %v421
          %v434 = vmul.f32 %v394, %v423
          %v435 = vmul.f32 %v395, %v425
          %v436 = vmul.f32 %v396, %v427
          %v437 = vmul.f32 %v397, %v429
          %v438 = vld [vmem:[%s289] sm:$0xff]
          %v439 = vld [vmem:[%s289 + $0x8] sm:$0xff]
          %v440 = vld [vmem:[%s289 + $0x10] sm:$0xff]
          %v441 = vld [vmem:[%s289 + $0x18] sm:$0xff]
          %v442 = vld [vmem:[%s289 + $0x20] sm:$0xff]
          %v443 = vld [vmem:[%s289 + $0x28] sm:$0xff]
          %v444 = vld [vmem:[%s289 + $0x30] sm:$0xff]
          %v445 = vld [vmem:[%s289 + $0x38] sm:$0xff]
          %v446 = vmul.f32 %v430, %v438
          %v447 = vmul.f32 %v431, %v439
          %v448 = vmul.f32 %v432, %v440
          %v449 = vmul.f32 %v433, %v441
          %v450 = vmul.f32 %v434, %v442
          %v451 = vmul.f32 %v435, %v443
          %v452 = vmul.f32 %v436, %v444
          %v453 = vmul.f32 %v437, %v445
          %v454 = vadd.f32 %v446, 0.0
          %v455 = vadd.f32 %v447, 0.0
          %v456 = vadd.f32 %v448, 0.0
          %v457 = vadd.f32 %v449, 0.0
          %v458 = vadd.f32 %v450, 0.0
          %v459 = vadd.f32 %v451, 0.0
          %v460 = vadd.f32 %v452, 0.0
          %v461 = vadd.f32 %v453, 0.0
          %462 = vadd.xlane.f32.xlu0 %v454
          %v463 = vpop.xlane.xlu0 %462
          %464 = vadd.xlane.f32.xlu0 %v455
          %v465 = vpop.xlane.xlu0 %464
          %466 = vadd.xlane.f32.xlu0 %v456
          %v467 = vpop.xlane.xlu0 %466
          %468 = vadd.xlane.f32.xlu0 %v457
          %v469 = vpop.xlane.xlu0 %468
          %470 = vadd.xlane.f32.xlu0 %v458
          %v471 = vpop.xlane.xlu0 %470
          %472 = vadd.xlane.f32.xlu0 %v459
          %v473 = vpop.xlane.xlu0 %472
          %474 = vadd.xlane.f32.xlu0 %v460
          %v475 = vpop.xlane.xlu0 %474
          %476 = vadd.xlane.f32.xlu0 %v461
          %v477 = vpop.xlane.xlu0 %476
          %v478 = vstv %s355
          %vm479 = vcmp.eq.s32.totalorder %v340, %v478
          %v480 = vld [vmem:[%s337] sm:$0xff]
          %v481 = vld [vmem:[%s337 + $0x8] sm:$0xff]
          %v482 = vld [vmem:[%s337 + $0x10] sm:$0xff]
          %v483 = vld [vmem:[%s337 + $0x18] sm:$0xff]
          %v484 = vld [vmem:[%s337 + $0x20] sm:$0xff]
          %v485 = vld [vmem:[%s337 + $0x28] sm:$0xff]
          %v486 = vld [vmem:[%s337 + $0x30] sm:$0xff]
          %v487 = vld [vmem:[%s337 + $0x38] sm:$0xff]
          %v488 = vsel %vm479, 1, 0
          %vm489 = vcmp.eq.s32.totalorder %v488, 1
          %v490 = vsel %vm489, %v463, %v480
          %v491 = vsel %vm489, %v465, %v481
          %v492 = vsel %vm489, %v467, %v482
          %v493 = vsel %vm489, %v469, %v483
          %v494 = vsel %vm489, %v471, %v484
          %v495 = vsel %vm489, %v473, %v485
          %v496 = vsel %vm489, %v475, %v486
          %v497 = vsel %vm489, %v477, %v487
          %498 = vst.msk [vmem:[%s337] sm:$0xff] %vm345, %v490
          %499 = vst.msk [vmem:[%s337 + $0x8] sm:$0xff] %vm345, %v491
          %500 = vst.msk [vmem:[%s337 + $0x10] sm:$0xff] %vm345, %v492
          %501 = vst.msk [vmem:[%s337 + $0x18] sm:$0xff] %vm345, %v493
          %502 = vst.msk [vmem:[%s337 + $0x20] sm:$0xff] %vm345, %v494
          %503 = vst.msk [vmem:[%s337 + $0x28] sm:$0xff] %vm345, %v495
          %504 = vst.msk [vmem:[%s337 + $0x30] sm:$0xff] %vm345, %v496
          %505 = vst.msk [vmem:[%s337 + $0x38] sm:$0xff] %vm345, %v497
        $region57: #{tpu_custom_call.1} parent=35 // loop_footer
          %s357 = sadd.s32 %s355, 1
        $region58: #{tpu_custom_call.1} parent=35 // loop_footer_branch
          %354 = sbr.rel target = $region54
        $region59: #{tpu_custom_call.1} parent=35 // loop_exit
          _
        %s506 = smul.u32 8, %s26
        %p507 = scmp.lt.s32.totalorder %s506, 15
        %s508 = scalar_select %p507, %s506, 15
        %p509 = scmp.lt.s32.totalorder %s27, 0
        %s510 = scalar_select %p509, %s27, 0
        %s511 = sadd.s32 %s510, %s508
        %s512 = smul.addr %s511, 8
        %s513 = scalar_lea.vmem %s4, %s512
        // Predicated region
        $region60: #{tpu_custom_call.1} parent=35 // pred_check
          %p514 = pneg %p158
        $region61: #{tpu_custom_call.1} parent=35 // pred_check_branch
          %516 = sbr.rel (%p514) target = $region63
        $region62: #{tpu_custom_call.1} parent=35 // pred_region
          %s517 = smul.u32 8, %s26
        $region63: #{tpu_custom_call.1} parent=35 // pred_fallthru
          _
      $region36: #{tpu_custom_call.1} parent=5 // pred_fallthru
        _
      %p518 = scmp.le.s32.totalorder 2, %s17
      // Predicated region
      $region64: #{tpu_custom_call.1} parent=5 // pred_check
        %p519 = pneg %p518
      $region65: #{tpu_custom_call.1} parent=5 // pred_check_branch
        %521 = sbr.rel (%p519) target = $region67
      $region66: #{tpu_custom_call.1} parent=5 // pred_region
        %s522 = ssub.s32 %s17, 2
        // Predicated region
        $region68: #{tpu_custom_call.1} parent=66 // pred_check
          %p523 = pneg %p164
        $region69: #{tpu_custom_call.1} parent=66 // pred_check_branch
          %525 = sbr.rel (%p523) target = $region71
        $region70: #{tpu_custom_call.1} parent=66 // pred_region
          %s526 = smul.u32 8, %s28
          %p527 = scmp.lt.s32.totalorder %s526, 15
          %s528 = scalar_select %p527, %s526, 15
          %p529 = scmp.lt.s32.totalorder %s29, 0
          %s530 = scalar_select %p529, %s29, 0
          %s531 = sadd.s32 %s530, %s528
          %s532 = smul.addr %s531, 8
          %s533 = scalar_lea.vmem %s4, %s532
        $region71: #{tpu_custom_call.1} parent=66 // pred_fallthru
          _
      $region67: #{tpu_custom_call.1} parent=5 // pred_fallthru
        _
    $region6: #{tpu_custom_call.1} parent=1 // loop_footer
      %s21 = sadd.s32 1, %s17
    $region7: #{tpu_custom_call.1} parent=1 // loop_footer_branch
      %16 = sbr.rel target = $region3
    $region8: #{tpu_custom_call.1} parent=1 // loop_exit
      _
    %534 = vsyncpa [#allocation3], 1
    %s535 = scalar_lea.sflag [#allocation3], 1
    %536 = vsyncpa %s535, 1
    %537 = vsyncpa [#allocation5], 1
    %s538 = scalar_lea.sflag [#allocation5], 1
    %539 = vsyncpa %s538, 1
    %540 = vsyncpa [#allocation8], 1
    %s541 = scalar_lea.sflag [#allocation8], 1
    %542 = vsyncpa %s541, 1

</llo_original>
